<compile_context>
chip_gen: v5e
topology: v5e:2x2
jax: 0.10.0
libtpu: 0.0.40
codegen_flags: <defaults>
</compile_context>

<pallas_src>
import functools

import jax
import jax.numpy as jnp
from jax.experimental import pallas as pl
from jax.experimental.pallas import tpu as pltpu


def _round_up(x, m):
    return ((x + m - 1) // m) * m


def _make_kernel(A, D, H1, H2, TB, B, compute_dtype):
    """Builds the per-block kernel; all sizes are static Python ints."""
    ragged = (B % TB) != 0

    def kernel(emb_ref, bleu_ref, w1e_ref, w2_ref, sc_ref,
               out_sum_ref, out_w_ref):
        # Hoist constant loads out of the per-agent loop (avoid re-broadcasts).
        w1e = w1e_ref[...]                       # (D, H1)   compute_dtype
        w2 = w2_ref[...]                         # (H1, H2)  compute_dtype
        sc = sc_ref[...]                         # (8, P)    f32, packed params
        w1b = sc[0:1, :H1]                       # bleu column of W1
        b1 = sc[1:2, :H1]
        b2 = sc[2:3, :H2]
        w3 = sc[3:4, :H2]                        # (1, H2) row form of (H2, 1)
        b3 = sc[4:5, 0:1]                        # (1, 1)
        bleu = bleu_ref[...]                     # (TB, A)   f32, lane-dense

        if ragged:
            rows = (pl.program_id(0) * TB
                    + jax.lax.broadcasted_iota(jnp.int32, (TB, 1), 0))
            valid = rows < B                     # mask the ragged tail block
        else:
            valid = None

        lane_ids = jax.lax.broadcasted_iota(jnp.int32, (TB, A), 1)
        w_blk = jnp.zeros((TB, A), jnp.float32)
        acc = jnp.zeros((TB, D), jnp.float32)

        for a in range(A):                       # A is small & static: unrolled
            emb_a = emb_ref[a]                   # (TB, D): free leading-dim index
            bleu_a = bleu[:, a:a + 1]            # (TB, 1): static lane slice

            # Layer 1 (concat folded in) + ReLU.  MXU, f32 accumulation.
            h1 = jnp.dot(emb_a, w1e, preferred_element_type=jnp.float32)
            h1 = jnp.maximum(h1 + bleu_a * w1b + b1, 0.0)           # (TB, H1)

            # Layer 2 + ReLU.  MXU.
            h2 = jnp.dot(h1.astype(compute_dtype), w2,
                         preferred_element_type=jnp.float32) + b2
            h2 = jnp.maximum(h2, 0.0)                               # (TB, H2)

            # Layer 3 (H2 -> 1) + Sigmoid: VPU multiply + lane reduction + EUP.
            logit = jnp.sum(h2 * w3, axis=-1, keepdims=True) + b3   # (TB, 1)
            w_a = jax.nn.sigmoid(logit)
            if valid is not None:
                w_a = jnp.where(valid, w_a, 0.0)

            # Agent sum as slab multiply-add (replaces the old sel matmul).
            acc = acc + w_a * emb_a.astype(jnp.float32)
            # Lane-pack this agent's weights into column a of the (TB, A) block.
            w_blk = jnp.where(lane_ids == a, w_a, w_blk)

        out_sum_ref[...] = acc                                      # (TB, D)
        out_w_ref[...] = w_blk                                      # (TB, A)

    return kernel


@functools.partial(jax.jit, static_argnames=("batch_tile", "input_dtype"))
def agent_weighting_forward(agent_embeddings, bleu_scores, params, *,
                            batch_tile=512, input_dtype=jnp.bfloat16):
    """AgentWeightingModel forward pass.

    agent_embeddings: (B, A, D) float32
    bleu_scores:      (B, A, 1) float32
    batch_tile:       batches processed per grid step (default 512; VMEM is not
                      a constraint at these sizes on any TPU generation).
    input_dtype:      streaming dtype for embeddings / matmul weights
                      (bf16 default; accumulation is always f32).
    returns (weighted_sum (B, D) f32, weights (B, A) f32)
    """
    B, A, D = agent_embeddings.shape
    w1, b1, w2, b2, w3, b3 = params
    H1 = w1.shape[1]
    H2 = w2.shape[1]

    # Batch tile: multiple of 8 (sublane alignment), capped at ceil(B/2) so the
    # parallel grid axis has >=2 steps whenever possible (v7x megacore).
    TB = min(_round_up(batch_tile, 8), _round_up(max(1, -(-B // 2)), 8))
    TB = max(8, TB)
    NB = pl.cdiv(B, TB)            # ragged last block; no host-side padding

    # Agent-major embeddings streamed in input_dtype (cast fuses with the
    # transpose into a single host-side copy; bf16 halves its written bytes).
    emb_am = jnp.transpose(agent_embeddings, (1, 0, 2)).astype(input_dtype)
    bleu2d = jnp.squeeze(bleu_scores, axis=-1).astype(jnp.float32)   # (B, A)

    # Fold the concat into layer 1; pack the five small params into one tile.
    w1e = w1[:D, :].astype(input_dtype)          # (D, H1)
    w2c = w2.astype(input_dtype)                 # (H1, H2)
    P = max(H1, H2)
    sc = jnp.zeros((8, P), jnp.float32)
    sc = sc.at[0, :H1].set(w1[D, :])             # bleu column of W1
    sc = sc.at[1, :H1].set(b1)
    sc = sc.at[2, :H2].set(b2)
    sc = sc.at[3, :H2].set(w3[:, 0])
    sc = sc.at[4, 0].set(b3[0])

    kernel = _make_kernel(A, D, H1, H2, TB, B, input_dtype)
    const = lambda i: (0, 0)
    single = pl.Buffered(1)        # constant-index inputs: no double buffering

    out_sum, out_w = pl.pallas_call(
        kernel,
        out_shape=(
            jax.ShapeDtypeStruct((B, D), jnp.float32),
            jax.ShapeDtypeStruct((B, A), jnp.float32),
        ),
        grid_spec=pltpu.PrefetchScalarGridSpec(
            num_scalar_prefetch=0,
            grid=(NB,),
            in_specs=[
                pl.BlockSpec((A, TB, D), lambda i: (0, i, 0)),   # embeddings
                pl.BlockSpec((TB, A), lambda i: (i, 0)),         # bleu (lane-dense)
                pl.BlockSpec((D, H1), const, pipeline_mode=single),
                pl.BlockSpec((H1, H2), const, pipeline_mode=single),
                pl.BlockSpec((8, P), const, pipeline_mode=single),
            ],
            out_specs=[
                pl.BlockSpec((TB, D), lambda i: (i, 0)),         # weighted sum
                pl.BlockSpec((TB, A), lambda i: (i, 0)),         # weights
            ],
        ),
        compiler_params=pltpu.CompilerParams(
            dimension_semantics=("parallel",),
            vmem_limit_bytes=64 * 1024 * 1024,
        ),
    )(emb_am, bleu2d, w1e, w2c, sc)

    return out_sum, out_w


def init_params(key, embedding_dim, h1=128, h2=64):
    """Deterministic parameter init matching the nn.Linear shapes."""
    k1, k2, k3, k4, k5, k6 = jax.random.split(key, 6)
    din = embedding_dim + 1
    w1 = jax.random.uniform(k1, (din, h1), jnp.float32, -1.0, 1.0) / jnp.sqrt(din)
    b1 = jax.random.uniform(k2, (h1,), jnp.float32, -1.0, 1.0) / jnp.sqrt(din)
    w2 = jax.random.uniform(k3, (h1, h2), jnp.float32, -1.0, 1.0) / jnp.sqrt(h1)
    b2 = jax.random.uniform(k4, (h2,), jnp.float32, -1.0, 1.0) / jnp.sqrt(h1)
    w3 = jax.random.uniform(k5, (h2, 1), jnp.float32, -1.0, 1.0) / jnp.sqrt(h2)
    b3 = jax.random.uniform(k6, (1,), jnp.float32, -1.0, 1.0) / jnp.sqrt(h2)
    return (w1, b1, w2, b2, w3, b3)


def reference_forward(agent_embeddings, bleu_scores, params):
    """Pure-JAX f32 reference mirroring the PyTorch module."""
    w1, b1, w2, b2, w3, b3 = params
    x = jnp.concatenate([agent_embeddings, bleu_scores], axis=-1)
    h = jnp.maximum(x @ w1 + b1, 0.0)
    h = jnp.maximum(h @ w2 + b2, 0.0)
    w = jax.nn.sigmoid(h @ w3 + b3)[..., 0]          # (B, A)
    out = jnp.sum(w[..., None] * agent_embeddings, axis=1)
    return out, w


if __name__ == "__main__":
    B, A, D = 12, 5, 256          # small demo shapes (model default D is 768)

    key = jax.random.PRNGKey(0)
    k_emb, k_bleu, k_params = jax.random.split(key, 3)

    agent_embeddings = jax.random.normal(k_emb, (B, A, D), jnp.float32)
    bleu_scores = jax.random.uniform(k_bleu, (B, A, 1), jnp.float32)
    params = init_params(k_params, D)

    ref_sum, ref_w = reference_forward(agent_embeddings, bleu_scores, params)

    # f32 streaming path: tight numerical check (B=12 -> TB=8, 2 grid steps,
    # ragged tail block of 4 valid rows -> exercises tiling + tail masking).
    out32, w32 = agent_weighting_forward(
        agent_embeddings, bleu_scores, params, input_dtype=jnp.float32)
    jax.block_until_ready((out32, w32))
    assert out32.shape == (B, D) and w32.shape == (B, A)
    assert jnp.allclose(out32, ref_sum, atol=1e-4, rtol=1e-4)
    assert jnp.allclose(w32, ref_w, atol=1e-4, rtol=1e-4)

    # Default bf16 streaming path: looser tolerance (bf16 inputs, f32 accum).
    out_sum, weights = agent_weighting_forward(agent_embeddings, bleu_scores, params)
    jax.block_until_ready((out_sum, weights))
    assert out_sum.shape == (B, D) and weights.shape == (B, A)
    assert jnp.allclose(out_sum, ref_sum, atol=5e-2, rtol=2e-2)
    assert jnp.allclose(weights, ref_w, atol=1e-2, rtol=1e-2)

    print("KERNEL_OK")
</pallas_src>

<mosaic_0001>
module attributes {stable_mosaic.version = 11 : i64} {
  func.func @kernel(%arg0: i32, %arg1: memref<5x8x256xf32, #tpu.memory_space<vmem>>, %arg2: memref<8x5xf32, #tpu.memory_space<vmem>>, %arg3: memref<256x128xf32, #tpu.memory_space<vmem>>, %arg4: memref<128x64xf32, #tpu.memory_space<vmem>>, %arg5: memref<8x128xf32, #tpu.memory_space<vmem>>, %arg6: memref<8x256xf32, #tpu.memory_space<vmem>>, %arg7: memref<8x5xf32, #tpu.memory_space<vmem>>) attributes {dimension_semantics = [#tpu.dimension_semantics<parallel>], iteration_bounds = array<i64: 2>, scalar_prefetch = 0 : i64, scratch_operands = 0 : i64, tpu.core_type = #tpu.core_type<tc>, window_params = [{transform_indices = @transform_0, window_bounds = array<i64: 5, 8, 256>}, {transform_indices = @transform_1, window_bounds = array<i64: 8, 5>}, {pipeline_mode = #tpu.pipeline_mode<synchronous>, transform_indices = @transform_2, window_bounds = array<i64: 256, 128>}, {pipeline_mode = #tpu.pipeline_mode<synchronous>, transform_indices = @transform_3, window_bounds = array<i64: 128, 64>}, {pipeline_mode = #tpu.pipeline_mode<synchronous>, transform_indices = @transform_4, window_bounds = array<i64: 8, 128>}, {transform_indices = @transform_5, window_bounds = array<i64: 8, 256>}, {transform_indices = @transform_6, window_bounds = array<i64: 8, 5>}]} {
    %c0 = arith.constant 0 : index
    %c0_0 = arith.constant 0 : index
    %0 = vector.load %arg3[%c0, %c0_0] : memref<256x128xf32, #tpu.memory_space<vmem>>, vector<256x128xf32>
    %c0_1 = arith.constant 0 : index
    %c0_2 = arith.constant 0 : index
    %1 = vector.load %arg4[%c0_1, %c0_2] : memref<128x64xf32, #tpu.memory_space<vmem>>, vector<128x64xf32>
    %c0_3 = arith.constant 0 : index
    %c0_4 = arith.constant 0 : index
    %2 = vector.load %arg5[%c0_3, %c0_4] : memref<8x128xf32, #tpu.memory_space<vmem>>, vector<8x128xf32>
    %3 = vector.extract_strided_slice %2 {offsets = [0, 0], sizes = [1, 128], strides = [1, 1]} : vector<8x128xf32> to vector<1x128xf32>
    %4 = vector.extract_strided_slice %2 {offsets = [1, 0], sizes = [1, 128], strides = [1, 1]} : vector<8x128xf32> to vector<1x128xf32>
    %5 = vector.extract_strided_slice %2 {offsets = [2, 0], sizes = [1, 64], strides = [1, 1]} : vector<8x128xf32> to vector<1x64xf32>
    %6 = vector.extract_strided_slice %2 {offsets = [3, 0], sizes = [1, 64], strides = [1, 1]} : vector<8x128xf32> to vector<1x64xf32>
    %7 = vector.extract_strided_slice %2 {offsets = [4, 0], sizes = [1, 1], strides = [1, 1]} : vector<8x128xf32> to vector<1x1xf32>
    %c0_5 = arith.constant 0 : index
    %c0_6 = arith.constant 0 : index
    %8 = vector.load %arg2[%c0_5, %c0_6] : memref<8x5xf32, #tpu.memory_space<vmem>>, vector<8x5xf32>
    %c8_i32 = arith.constant 8 : i32
    %9 = arith.muli %arg0, %c8_i32 : i32
    %10 = tpu.iota {dimensions = array<i32: 0>} : vector<8x1xi32>
    %11 = vector.broadcast %9 : i32 to vector<8x1xi32>
    %12 = arith.addi %11, %10 : vector<8x1xi32>
    %c12_i32 = arith.constant 12 : i32
    %13 = vector.broadcast %c12_i32 : i32 to vector<8x1xi32>
    %14 = arith.cmpi slt, %12, %13 : vector<8x1xi32>
    %15 = tpu.iota {dimensions = array<i32: 1>} : vector<8x5xi32>
    %cst = arith.constant 0.000000e+00 : f32
    %16 = vector.broadcast %cst : f32 to vector<8x5xf32>
    %cst_7 = arith.constant 0.000000e+00 : f32
    %17 = vector.broadcast %cst_7 : f32 to vector<8x256xf32>
    %c0_8 = arith.constant 0 : index
    %c0_9 = arith.constant 0 : index
    %c0_10 = arith.constant 0 : index
    %18 = vector.load %arg1[%c0_8, %c0_9, %c0_10] : memref<5x8x256xf32, #tpu.memory_space<vmem>>, vector<1x8x256xf32>
    %19 = vector.shape_cast %18 : vector<1x8x256xf32> to vector<8x256xf32>
    %20 = vector.extract_strided_slice %8 {offsets = [0, 0], sizes = [8, 1], strides = [1, 1]} : vector<8x5xf32> to vector<8x1xf32>
    %cst_11 = arith.constant dense<0.000000e+00> : vector<8x128xf32>
    %21 = tpu.matmul %19, %0, %cst_11 {dimension_numbers = #tpu.dot_dimension_numbers<[1], [0], [0], [1], [0, 0, 1, 1], [], []>} : vector<8x256xf32>, vector<256x128xf32>, vector<8x128xf32> -> vector<8x128xf32>
    %22 = vector.broadcast %20 : vector<8x1xf32> to vector<8x128xf32>
    %23 = vector.broadcast %3 : vector<1x128xf32> to vector<8x128xf32>
    %24 = arith.mulf %22, %23 : vector<8x128xf32>
    %25 = arith.addf %21, %24 : vector<8x128xf32>
    %26 = vector.broadcast %4 : vector<1x128xf32> to vector<8x128xf32>
    %27 = arith.addf %25, %26 : vector<8x128xf32>
    %cst_12 = arith.constant 0.000000e+00 : f32
    %28 = vector.broadcast %cst_12 : f32 to vector<8x128xf32>
    %29 = arith.maximumf %27, %28 : vector<8x128xf32>
    %cst_13 = arith.constant dense<0.000000e+00> : vector<8x64xf32>
    %30 = tpu.matmul %29, %1, %cst_13 {dimension_numbers = #tpu.dot_dimension_numbers<[1], [0], [0], [1], [0, 0, 1, 1], [], []>} : vector<8x128xf32>, vector<128x64xf32>, vector<8x64xf32> -> vector<8x64xf32>
    %31 = vector.broadcast %5 : vector<1x64xf32> to vector<8x64xf32>
    %32 = arith.addf %30, %31 : vector<8x64xf32>
    %cst_14 = arith.constant 0.000000e+00 : f32
    %33 = vector.broadcast %cst_14 : f32 to vector<8x64xf32>
    %34 = arith.maximumf %32, %33 : vector<8x64xf32>
    %35 = vector.broadcast %6 : vector<1x64xf32> to vector<8x64xf32>
    %36 = arith.mulf %34, %35 : vector<8x64xf32>
    %cst_15 = arith.constant dense<0.000000e+00> : vector<8xf32>
    %37 = vector.multi_reduction <add>, %36, %cst_15 [1] : vector<8x64xf32> to vector<8xf32>
    %38 = vector.shape_cast %37 : vector<8xf32> to vector<8x1xf32>
    %39 = vector.broadcast %7 : vector<1x1xf32> to vector<8x1xf32>
    %40 = arith.addf %38, %39 : vector<8x1xf32>
    %41 = arith.negf %40 : vector<8x1xf32>
    %42 = math.exp %41 : vector<8x1xf32>
    %cst_16 = arith.constant 1.000000e+00 : f32
    %43 = vector.broadcast %cst_16 : f32 to vector<8x1xf32>
    %44 = arith.addf %43, %42 : vector<8x1xf32>
    %45 = arith.divf %43, %44 : vector<8x1xf32>
    %cst_17 = arith.constant 0.000000e+00 : f32
    %46 = vector.broadcast %cst_17 : f32 to vector<8x1xf32>
    %47 = arith.select %14, %45, %46 : vector<8x1xi1>, vector<8x1xf32>
    %48 = vector.broadcast %47 : vector<8x1xf32> to vector<8x256xf32>
    %49 = arith.mulf %48, %19 : vector<8x256xf32>
    %50 = arith.addf %17, %49 : vector<8x256xf32>
    %c0_i32 = arith.constant 0 : i32
    %51 = vector.broadcast %c0_i32 : i32 to vector<8x5xi32>
    %52 = arith.cmpi eq, %15, %51 : vector<8x5xi32>
    %53 = vector.shape_cast %47 : vector<8x1xf32> to vector<8x1xf32>
    %54 = vector.broadcast %53 : vector<8x1xf32> to vector<8x5xf32>
    %55 = arith.select %52, %54, %16 : vector<8x5xi1>, vector<8x5xf32>
    %c1 = arith.constant 1 : index
    %c0_18 = arith.constant 0 : index
    %c0_19 = arith.constant 0 : index
    %56 = vector.load %arg1[%c1, %c0_18, %c0_19] : memref<5x8x256xf32, #tpu.memory_space<vmem>>, vector<1x8x256xf32>
    %57 = vector.shape_cast %56 : vector<1x8x256xf32> to vector<8x256xf32>
    %58 = vector.extract_strided_slice %8 {offsets = [0, 1], sizes = [8, 1], strides = [1, 1]} : vector<8x5xf32> to vector<8x1xf32>
    %cst_20 = arith.constant dense<0.000000e+00> : vector<8x128xf32>
    %59 = tpu.matmul %57, %0, %cst_20 {dimension_numbers = #tpu.dot_dimension_numbers<[1], [0], [0], [1], [0, 0, 1, 1], [], []>} : vector<8x256xf32>, vector<256x128xf32>, vector<8x128xf32> -> vector<8x128xf32>
    %60 = vector.broadcast %58 : vector<8x1xf32> to vector<8x128xf32>
    %61 = vector.broadcast %3 : vector<1x128xf32> to vector<8x128xf32>
    %62 = arith.mulf %60, %61 : vector<8x128xf32>
    %63 = arith.addf %59, %62 : vector<8x128xf32>
    %64 = vector.broadcast %4 : vector<1x128xf32> to vector<8x128xf32>
    %65 = arith.addf %63, %64 : vector<8x128xf32>
    %cst_21 = arith.constant 0.000000e+00 : f32
    %66 = vector.broadcast %cst_21 : f32 to vector<8x128xf32>
    %67 = arith.maximumf %65, %66 : vector<8x128xf32>
    %cst_22 = arith.constant dense<0.000000e+00> : vector<8x64xf32>
    %68 = tpu.matmul %67, %1, %cst_22 {dimension_numbers = #tpu.dot_dimension_numbers<[1], [0], [0], [1], [0, 0, 1, 1], [], []>} : vector<8x128xf32>, vector<128x64xf32>, vector<8x64xf32> -> vector<8x64xf32>
    %69 = vector.broadcast %5 : vector<1x64xf32> to vector<8x64xf32>
    %70 = arith.addf %68, %69 : vector<8x64xf32>
    %cst_23 = arith.constant 0.000000e+00 : f32
    %71 = vector.broadcast %cst_23 : f32 to vector<8x64xf32>
    %72 = arith.maximumf %70, %71 : vector<8x64xf32>
    %73 = vector.broadcast %6 : vector<1x64xf32> to vector<8x64xf32>
    %74 = arith.mulf %72, %73 : vector<8x64xf32>
    %cst_24 = arith.constant dense<0.000000e+00> : vector<8xf32>
    %75 = vector.multi_reduction <add>, %74, %cst_24 [1] : vector<8x64xf32> to vector<8xf32>
    %76 = vector.shape_cast %75 : vector<8xf32> to vector<8x1xf32>
    %77 = vector.broadcast %7 : vector<1x1xf32> to vector<8x1xf32>
    %78 = arith.addf %76, %77 : vector<8x1xf32>
    %79 = arith.negf %78 : vector<8x1xf32>
    %80 = math.exp %79 : vector<8x1xf32>
    %cst_25 = arith.constant 1.000000e+00 : f32
    %81 = vector.broadcast %cst_25 : f32 to vector<8x1xf32>
    %82 = arith.addf %81, %80 : vector<8x1xf32>
    %83 = arith.divf %81, %82 : vector<8x1xf32>
    %cst_26 = arith.constant 0.000000e+00 : f32
    %84 = vector.broadcast %cst_26 : f32 to vector<8x1xf32>
    %85 = arith.select %14, %83, %84 : vector<8x1xi1>, vector<8x1xf32>
    %86 = vector.broadcast %85 : vector<8x1xf32> to vector<8x256xf32>
    %87 = arith.mulf %86, %57 : vector<8x256xf32>
    %88 = arith.addf %50, %87 : vector<8x256xf32>
    %c1_i32 = arith.constant 1 : i32
    %89 = vector.broadcast %c1_i32 : i32 to vector<8x5xi32>
    %90 = arith.cmpi eq, %15, %89 : vector<8x5xi32>
    %91 = vector.shape_cast %85 : vector<8x1xf32> to vector<8x1xf32>
    %92 = vector.broadcast %91 : vector<8x1xf32> to vector<8x5xf32>
    %93 = arith.select %90, %92, %55 : vector<8x5xi1>, vector<8x5xf32>
    %c2 = arith.constant 2 : index
    %c0_27 = arith.constant 0 : index
    %c0_28 = arith.constant 0 : index
    %94 = vector.load %arg1[%c2, %c0_27, %c0_28] : memref<5x8x256xf32, #tpu.memory_space<vmem>>, vector<1x8x256xf32>
    %95 = vector.shape_cast %94 : vector<1x8x256xf32> to vector<8x256xf32>
    %96 = vector.extract_strided_slice %8 {offsets = [0, 2], sizes = [8, 1], strides = [1, 1]} : vector<8x5xf32> to vector<8x1xf32>
    %cst_29 = arith.constant dense<0.000000e+00> : vector<8x128xf32>
    %97 = tpu.matmul %95, %0, %cst_29 {dimension_numbers = #tpu.dot_dimension_numbers<[1], [0], [0], [1], [0, 0, 1, 1], [], []>} : vector<8x256xf32>, vector<256x128xf32>, vector<8x128xf32> -> vector<8x128xf32>
    %98 = vector.broadcast %96 : vector<8x1xf32> to vector<8x128xf32>
    %99 = vector.broadcast %3 : vector<1x128xf32> to vector<8x128xf32>
    %100 = arith.mulf %98, %99 : vector<8x128xf32>
    %101 = arith.addf %97, %100 : vector<8x128xf32>
    %102 = vector.broadcast %4 : vector<1x128xf32> to vector<8x128xf32>
    %103 = arith.addf %101, %102 : vector<8x128xf32>
    %cst_30 = arith.constant 0.000000e+00 : f32
    %104 = vector.broadcast %cst_30 : f32 to vector<8x128xf32>
    %105 = arith.maximumf %103, %104 : vector<8x128xf32>
    %cst_31 = arith.constant dense<0.000000e+00> : vector<8x64xf32>
    %106 = tpu.matmul %105, %1, %cst_31 {dimension_numbers = #tpu.dot_dimension_numbers<[1], [0], [0], [1], [0, 0, 1, 1], [], []>} : vector<8x128xf32>, vector<128x64xf32>, vector<8x64xf32> -> vector<8x64xf32>
    %107 = vector.broadcast %5 : vector<1x64xf32> to vector<8x64xf32>
    %108 = arith.addf %106, %107 : vector<8x64xf32>
    %cst_32 = arith.constant 0.000000e+00 : f32
    %109 = vector.broadcast %cst_32 : f32 to vector<8x64xf32>
    %110 = arith.maximumf %108, %109 : vector<8x64xf32>
    %111 = vector.broadcast %6 : vector<1x64xf32> to vector<8x64xf32>
    %112 = arith.mulf %110, %111 : vector<8x64xf32>
    %cst_33 = arith.constant dense<0.000000e+00> : vector<8xf32>
    %113 = vector.multi_reduction <add>, %112, %cst_33 [1] : vector<8x64xf32> to vector<8xf32>
    %114 = vector.shape_cast %113 : vector<8xf32> to vector<8x1xf32>
    %115 = vector.broadcast %7 : vector<1x1xf32> to vector<8x1xf32>
    %116 = arith.addf %114, %115 : vector<8x1xf32>
    %117 = arith.negf %116 : vector<8x1xf32>
    %118 = math.exp %117 : vector<8x1xf32>
    %cst_34 = arith.constant 1.000000e+00 : f32
    %119 = vector.broadcast %cst_34 : f32 to vector<8x1xf32>
    %120 = arith.addf %119, %118 : vector<8x1xf32>
    %121 = arith.divf %119, %120 : vector<8x1xf32>
    %cst_35 = arith.constant 0.000000e+00 : f32
    %122 = vector.broadcast %cst_35 : f32 to vector<8x1xf32>
    %123 = arith.select %14, %121, %122 : vector<8x1xi1>, vector<8x1xf32>
    %124 = vector.broadcast %123 : vector<8x1xf32> to vector<8x256xf32>
    %125 = arith.mulf %124, %95 : vector<8x256xf32>
    %126 = arith.addf %88, %125 : vector<8x256xf32>
    %c2_i32 = arith.constant 2 : i32
    %127 = vector.broadcast %c2_i32 : i32 to vector<8x5xi32>
    %128 = arith.cmpi eq, %15, %127 : vector<8x5xi32>
    %129 = vector.shape_cast %123 : vector<8x1xf32> to vector<8x1xf32>
    %130 = vector.broadcast %129 : vector<8x1xf32> to vector<8x5xf32>
    %131 = arith.select %128, %130, %93 : vector<8x5xi1>, vector<8x5xf32>
    %c3 = arith.constant 3 : index
    %c0_36 = arith.constant 0 : index
    %c0_37 = arith.constant 0 : index
    %132 = vector.load %arg1[%c3, %c0_36, %c0_37] : memref<5x8x256xf32, #tpu.memory_space<vmem>>, vector<1x8x256xf32>
    %133 = vector.shape_cast %132 : vector<1x8x256xf32> to vector<8x256xf32>
    %134 = vector.extract_strided_slice %8 {offsets = [0, 3], sizes = [8, 1], strides = [1, 1]} : vector<8x5xf32> to vector<8x1xf32>
    %cst_38 = arith.constant dense<0.000000e+00> : vector<8x128xf32>
    %135 = tpu.matmul %133, %0, %cst_38 {dimension_numbers = #tpu.dot_dimension_numbers<[1], [0], [0], [1], [0, 0, 1, 1], [], []>} : vector<8x256xf32>, vector<256x128xf32>, vector<8x128xf32> -> vector<8x128xf32>
    %136 = vector.broadcast %134 : vector<8x1xf32> to vector<8x128xf32>
    %137 = vector.broadcast %3 : vector<1x128xf32> to vector<8x128xf32>
    %138 = arith.mulf %136, %137 : vector<8x128xf32>
    %139 = arith.addf %135, %138 : vector<8x128xf32>
    %140 = vector.broadcast %4 : vector<1x128xf32> to vector<8x128xf32>
    %141 = arith.addf %139, %140 : vector<8x128xf32>
    %cst_39 = arith.constant 0.000000e+00 : f32
    %142 = vector.broadcast %cst_39 : f32 to vector<8x128xf32>
    %143 = arith.maximumf %141, %142 : vector<8x128xf32>
    %cst_40 = arith.constant dense<0.000000e+00> : vector<8x64xf32>
    %144 = tpu.matmul %143, %1, %cst_40 {dimension_numbers = #tpu.dot_dimension_numbers<[1], [0], [0], [1], [0, 0, 1, 1], [], []>} : vector<8x128xf32>, vector<128x64xf32>, vector<8x64xf32> -> vector<8x64xf32>
    %145 = vector.broadcast %5 : vector<1x64xf32> to vector<8x64xf32>
    %146 = arith.addf %144, %145 : vector<8x64xf32>
    %cst_41 = arith.constant 0.000000e+00 : f32
    %147 = vector.broadcast %cst_41 : f32 to vector<8x64xf32>
    %148 = arith.maximumf %146, %147 : vector<8x64xf32>
    %149 = vector.broadcast %6 : vector<1x64xf32> to vector<8x64xf32>
    %150 = arith.mulf %148, %149 : vector<8x64xf32>
    %cst_42 = arith.constant dense<0.000000e+00> : vector<8xf32>
    %151 = vector.multi_reduction <add>, %150, %cst_42 [1] : vector<8x64xf32> to vector<8xf32>
    %152 = vector.shape_cast %151 : vector<8xf32> to vector<8x1xf32>
    %153 = vector.broadcast %7 : vector<1x1xf32> to vector<8x1xf32>
    %154 = arith.addf %152, %153 : vector<8x1xf32>
    %155 = arith.negf %154 : vector<8x1xf32>
    %156 = math.exp %155 : vector<8x1xf32>
    %cst_43 = arith.constant 1.000000e+00 : f32
    %157 = vector.broadcast %cst_43 : f32 to vector<8x1xf32>
    %158 = arith.addf %157, %156 : vector<8x1xf32>
    %159 = arith.divf %157, %158 : vector<8x1xf32>
    %cst_44 = arith.constant 0.000000e+00 : f32
    %160 = vector.broadcast %cst_44 : f32 to vector<8x1xf32>
    %161 = arith.select %14, %159, %160 : vector<8x1xi1>, vector<8x1xf32>
    %162 = vector.broadcast %161 : vector<8x1xf32> to vector<8x256xf32>
    %163 = arith.mulf %162, %133 : vector<8x256xf32>
    %164 = arith.addf %126, %163 : vector<8x256xf32>
    %c3_i32 = arith.constant 3 : i32
    %165 = vector.broadcast %c3_i32 : i32 to vector<8x5xi32>
    %166 = arith.cmpi eq, %15, %165 : vector<8x5xi32>
    %167 = vector.shape_cast %161 : vector<8x1xf32> to vector<8x1xf32>
    %168 = vector.broadcast %167 : vector<8x1xf32> to vector<8x5xf32>
    %169 = arith.select %166, %168, %131 : vector<8x5xi1>, vector<8x5xf32>
    %c4 = arith.constant 4 : index
    %c0_45 = arith.constant 0 : index
    %c0_46 = arith.constant 0 : index
    %170 = vector.load %arg1[%c4, %c0_45, %c0_46] : memref<5x8x256xf32, #tpu.memory_space<vmem>>, vector<1x8x256xf32>
    %171 = vector.shape_cast %170 : vector<1x8x256xf32> to vector<8x256xf32>
    %172 = vector.extract_strided_slice %8 {offsets = [0, 4], sizes = [8, 1], strides = [1, 1]} : vector<8x5xf32> to vector<8x1xf32>
    %cst_47 = arith.constant dense<0.000000e+00> : vector<8x128xf32>
    %173 = tpu.matmul %171, %0, %cst_47 {dimension_numbers = #tpu.dot_dimension_numbers<[1], [0], [0], [1], [0, 0, 1, 1], [], []>} : vector<8x256xf32>, vector<256x128xf32>, vector<8x128xf32> -> vector<8x128xf32>
    %174 = vector.broadcast %172 : vector<8x1xf32> to vector<8x128xf32>
    %175 = vector.broadcast %3 : vector<1x128xf32> to vector<8x128xf32>
    %176 = arith.mulf %174, %175 : vector<8x128xf32>
    %177 = arith.addf %173, %176 : vector<8x128xf32>
    %178 = vector.broadcast %4 : vector<1x128xf32> to vector<8x128xf32>
    %179 = arith.addf %177, %178 : vector<8x128xf32>
    %cst_48 = arith.constant 0.000000e+00 : f32
    %180 = vector.broadcast %cst_48 : f32 to vector<8x128xf32>
    %181 = arith.maximumf %179, %180 : vector<8x128xf32>
    %cst_49 = arith.constant dense<0.000000e+00> : vector<8x64xf32>
    %182 = tpu.matmul %181, %1, %cst_49 {dimension_numbers = #tpu.dot_dimension_numbers<[1], [0], [0], [1], [0, 0, 1, 1], [], []>} : vector<8x128xf32>, vector<128x64xf32>, vector<8x64xf32> -> vector<8x64xf32>
    %183 = vector.broadcast %5 : vector<1x64xf32> to vector<8x64xf32>
    %184 = arith.addf %182, %183 : vector<8x64xf32>
    %cst_50 = arith.constant 0.000000e+00 : f32
    %185 = vector.broadcast %cst_50 : f32 to vector<8x64xf32>
    %186 = arith.maximumf %184, %185 : vector<8x64xf32>
    %187 = vector.broadcast %6 : vector<1x64xf32> to vector<8x64xf32>
    %188 = arith.mulf %186, %187 : vector<8x64xf32>
    %cst_51 = arith.constant dense<0.000000e+00> : vector<8xf32>
    %189 = vector.multi_reduction <add>, %188, %cst_51 [1] : vector<8x64xf32> to vector<8xf32>
    %190 = vector.shape_cast %189 : vector<8xf32> to vector<8x1xf32>
    %191 = vector.broadcast %7 : vector<1x1xf32> to vector<8x1xf32>
    %192 = arith.addf %190, %191 : vector<8x1xf32>
    %193 = arith.negf %192 : vector<8x1xf32>
    %194 = math.exp %193 : vector<8x1xf32>
    %cst_52 = arith.constant 1.000000e+00 : f32
    %195 = vector.broadcast %cst_52 : f32 to vector<8x1xf32>
    %196 = arith.addf %195, %194 : vector<8x1xf32>
    %197 = arith.divf %195, %196 : vector<8x1xf32>
    %cst_53 = arith.constant 0.000000e+00 : f32
    %198 = vector.broadcast %cst_53 : f32 to vector<8x1xf32>
    %199 = arith.select %14, %197, %198 : vector<8x1xi1>, vector<8x1xf32>
    %200 = vector.broadcast %199 : vector<8x1xf32> to vector<8x256xf32>
    %201 = arith.mulf %200, %171 : vector<8x256xf32>
    %202 = arith.addf %164, %201 : vector<8x256xf32>
    %c4_i32 = arith.constant 4 : i32
    %203 = vector.broadcast %c4_i32 : i32 to vector<8x5xi32>
    %204 = arith.cmpi eq, %15, %203 : vector<8x5xi32>
    %205 = vector.shape_cast %199 : vector<8x1xf32> to vector<8x1xf32>
    %206 = vector.broadcast %205 : vector<8x1xf32> to vector<8x5xf32>
    %207 = arith.select %204, %206, %169 : vector<8x5xi1>, vector<8x5xf32>
    %c0_54 = arith.constant 0 : index
    %c0_55 = arith.constant 0 : index
    %208 = vector.load %arg6[%c0_54, %c0_55] : memref<8x256xf32, #tpu.memory_space<vmem>>, vector<8x256xf32>
    tpu.vector_store %arg6[%c0_54, %c0_55], %202 {strides = array<i32>} : memref<8x256xf32, #tpu.memory_space<vmem>>, vector<8x256xf32>,
    %c0_56 = arith.constant 0 : index
    %c0_57 = arith.constant 0 : index
    %209 = vector.load %arg7[%c0_56, %c0_57] : memref<8x5xf32, #tpu.memory_space<vmem>>, vector<8x5xf32>
    tpu.vector_store %arg7[%c0_56, %c0_57], %207 {strides = array<i32>} : memref<8x5xf32, #tpu.memory_space<vmem>>, vector<8x5xf32>,
    return
  }
  func.func @transform_0(%arg0: i32) -> (i32, i32, i32) {
    %c0_i32 = arith.constant 0 : i32
    %c0_i32_0 = arith.constant 0 : i32
    %c0_i32_1 = arith.constant 0 : i32
    return %c0_i32, %arg0, %c0_i32_0 : i32, i32, i32
  }
  func.func @transform_1(%arg0: i32) -> (i32, i32) {
    %c0_i32 = arith.constant 0 : i32
    %c0_i32_0 = arith.constant 0 : i32
    return %arg0, %c0_i32 : i32, i32
  }
  func.func @transform_2(%arg0: i32) -> (i32, i32) {
    %c0_i32 = arith.constant 0 : i32
    %c0_i32_0 = arith.constant 0 : i32
    %c0_i32_1 = arith.constant 0 : i32
    return %c0_i32, %c0_i32_0 : i32, i32
  }
  func.func @transform_3(%arg0: i32) -> (i32, i32) {
    %c0_i32 = arith.constant 0 : i32
    %c0_i32_0 = arith.constant 0 : i32
    %c0_i32_1 = arith.constant 0 : i32
    return %c0_i32, %c0_i32_0 : i32, i32
  }
  func.func @transform_4(%arg0: i32) -> (i32, i32) {
    %c0_i32 = arith.constant 0 : i32
    %c0_i32_0 = arith.constant 0 : i32
    %c0_i32_1 = arith.constant 0 : i32
    return %c0_i32, %c0_i32_0 : i32, i32
  }
  func.func @transform_5(%arg0: i32) -> (i32, i32) {
    %c0_i32 = arith.constant 0 : i32
    %c0_i32_0 = arith.constant 0 : i32
    return %arg0, %c0_i32 : i32, i32
  }
  func.func @transform_6(%arg0: i32) -> (i32, i32) {
    %c0_i32 = arith.constant 0 : i32
    %c0_i32_0 = arith.constant 0 : i32
    return %arg0, %c0_i32 : i32, i32
  }
}

</mosaic_0001>

<llo_original>
// kernel: agent_weighting_forward.1
$region0: #{agent_weighting_forward.1}
  #allocation0 [shape = 'u32[]', space=smem, size = 0x4, offset = 0x4, fixed_abs, tag = 'smem constant byte address 0x4 - core index']
  #allocation1 [shape = 'u32[72,128]{1,0:T(1,128)}', space=vmem, size = 0x9000, scoped, tag = 'internal scratch']
  %s0 = inlined_call_operand.vmem [shape: f32[5,12,256], index: 0, kind: input, shape index: {}]
  %s1 = inlined_call_operand.vmem [shape: f32[12,5], index: 1, kind: input, shape index: {}]
  %s2 = inlined_call_operand.vmem [shape: f32[256,128], index: 2, kind: input, shape index: {}]
  %s3 = inlined_call_operand.vmem [shape: f32[128,64], index: 3, kind: input, shape index: {}]
  %s4 = inlined_call_operand.vmem [shape: f32[8,128], index: 4, kind: input, shape index: {}]
  %s5 = inlined_call_operand.hbm [shape: f32[12,256], index: 5, kind: output, shape index: {0}]
  %s6 = inlined_call_operand.vmem [shape: f32[12,5], index: 6, kind: output, shape index: {1}]
  %7 = xla_tuple %s5, %s6
  %s8 = sld [smem:[#allocation0]]
  $region84: #{agent_weighting_forward.1} parent=0
    _
  %s10 = ssub.s32 1, %s8
  %s11 = scalar_select 0, %s10, %s8
  $region1: #{agent_weighting_forward.1} parent=0
    #allocation2 [shape = 'u8[81920]{0}', space=vmem, size = 0x14000, scoped, tag = 'input window, operand 0']
    #allocation3 [shape = 'u8[16384]{0}', space=vmem, size = 0x4000, scoped, tag = 'output window, operand 0']
    #allocation4 [shape = 's32[2]{0}', space=sflag, size = 0x8, scoped, tag = 'scoped memory for agent_weighting_forward.1']
    %12 = vsyncpa [#allocation4], 0
    %s13 = scalar_lea.sflag [#allocation4], 1
    %14 = vsyncpa %s13, 0
    loop: start=0, step=1, limit=4
    $region2: #{agent_weighting_forward.1} parent=1 // loop_pre_header
      _
    $region3: #{agent_weighting_forward.1} parent=1 // loop_header
      %s16 = sphi 0, %s20
      %p17 = scmp.ge.s32.totalorder %s16, 4
      %s26 = sphi 0, %s28
      %s29 = sphi 0, %s26
      %s30 = sphi 0, %s29
      %s46 = sphi 0, %s30
      %s52 = sphi 0, %s54
      %s55 = sphi 0, %s52
      %s56 = sphi 0, %s55
      %s72 = sphi 0, %s56
      %s76 = sphi 0, %s76
      %s78 = sphi 0, %s76
      %s79 = sphi 0, %s78
      %s93 = sphi 0, %s79
      %s97 = sphi 0, %s97
      %s99 = sphi 0, %s97
      %s100 = sphi 0, %s99
      %s114 = sphi 0, %s100
      %s118 = sphi 0, %s118
      %s120 = sphi 0, %s118
      %s121 = sphi 0, %s120
      %s135 = sphi 0, %s121
      %s141 = sphi 0, %s143
      %s144 = sphi 0, %s141
      %s145 = sphi 0, %s144
      %s161 = sphi 0, %s145
      %s167 = sphi 0, %s169
      %s170 = sphi 0, %s167
      %s171 = sphi 0, %s170
      %s187 = sphi 0, %s171
    $region4: #{agent_weighting_forward.1} parent=1 // loop_header_branch
      %19 = sbr.rel (%p17) target = $region8
    $region5: #{agent_weighting_forward.1} parent=1 // loop_body
      %s21 = ssub.s32 %s16, 1
      %s22 = ssub.s32 %s16, 2
      %s23 = sadd.s32 %s16, 1
      %s24 = ssub.s32 %s16, %s23
      %p25 = scmp.eq.s32.totalorder %s24, 0
      %s27 = sadd.s32 %s26, 1
      %s28 = scalar_select %p25, %s26, %s27
      %p31 = pneg %p25
      %p32 = scmp.eq.s32.totalorder %s16, 1
      %p33 = por %p31, %p32
      %p34 = scmp.ne.s32.totalorder %s26, %s29
      %p35 = scmp.eq.s32.totalorder %s16, 0
      %p36 = por %p34, %p35
      %p37 = scmp.ne.s32.totalorder %s26, %s29
      %p38 = scmp.eq.s32.totalorder %s21, 1
      %p39 = por %p37, %p38
      %p40 = scmp.ne.s32.totalorder %s29, %s30
      %p41 = scmp.eq.s32.totalorder %s21, 0
      %p42 = por %p40, %p41
      %p43 = scmp.ne.s32.totalorder %s29, %s30
      %p44 = scmp.eq.s32.totalorder %s22, 1
      %p45 = por %p43, %p44
      %p47 = scmp.ne.s32.totalorder %s30, %s46
      %p48 = scmp.eq.s32.totalorder %s22, 0
      %p49 = por %p47, %p48
      %s50 = ssub.s32 %s16, %s23
      %p51 = scmp.eq.s32.totalorder %s50, 0
      %s53 = sadd.s32 %s52, 1
      %s54 = scalar_select %p51, %s52, %s53
      %p57 = pneg %p51
      %p58 = scmp.eq.s32.totalorder %s16, 1
      %p59 = por %p57, %p58
      %p60 = scmp.ne.s32.totalorder %s52, %s55
      %p61 = scmp.eq.s32.totalorder %s16, 0
      %p62 = por %p60, %p61
      %p63 = scmp.ne.s32.totalorder %s52, %s55
      %p64 = scmp.eq.s32.totalorder %s21, 1
      %p65 = por %p63, %p64
      %p66 = scmp.ne.s32.totalorder %s55, %s56
      %p67 = scmp.eq.s32.totalorder %s21, 0
      %p68 = por %p66, %p67
      %p69 = scmp.ne.s32.totalorder %s55, %s56
      %p70 = scmp.eq.s32.totalorder %s22, 1
      %p71 = por %p69, %p70
      %p73 = scmp.ne.s32.totalorder %s56, %s72
      %p74 = scmp.eq.s32.totalorder %s22, 0
      %p75 = por %p73, %p74
      %s77 = sadd.s32 %s76, 1
      %p80 = scmp.eq.s32.totalorder %s16, 1
      %p81 = scmp.ne.s32.totalorder %s76, %s78
      %p82 = scmp.eq.s32.totalorder %s16, 0
      %p83 = por %p81, %p82
      %p84 = scmp.ne.s32.totalorder %s76, %s78
      %p85 = scmp.eq.s32.totalorder %s21, 1
      %p86 = por %p84, %p85
      %p87 = scmp.ne.s32.totalorder %s78, %s79
      %p88 = scmp.eq.s32.totalorder %s21, 0
      %p89 = por %p87, %p88
      %p90 = scmp.ne.s32.totalorder %s78, %s79
      %p91 = scmp.eq.s32.totalorder %s22, 1
      %p92 = por %p90, %p91
      %p94 = scmp.ne.s32.totalorder %s79, %s93
      %p95 = scmp.eq.s32.totalorder %s22, 0
      %p96 = por %p94, %p95
      %s98 = sadd.s32 %s97, 1
      %p101 = scmp.eq.s32.totalorder %s16, 1
      %p102 = scmp.ne.s32.totalorder %s97, %s99
      %p103 = scmp.eq.s32.totalorder %s16, 0
      %p104 = por %p102, %p103
      %p105 = scmp.ne.s32.totalorder %s97, %s99
      %p106 = scmp.eq.s32.totalorder %s21, 1
      %p107 = por %p105, %p106
      %p108 = scmp.ne.s32.totalorder %s99, %s100
      %p109 = scmp.eq.s32.totalorder %s21, 0
      %p110 = por %p108, %p109
      %p111 = scmp.ne.s32.totalorder %s99, %s100
      %p112 = scmp.eq.s32.totalorder %s22, 1
      %p113 = por %p111, %p112
      %p115 = scmp.ne.s32.totalorder %s100, %s114
      %p116 = scmp.eq.s32.totalorder %s22, 0
      %p117 = por %p115, %p116
      %s119 = sadd.s32 %s118, 1
      %p122 = scmp.eq.s32.totalorder %s16, 1
      %p123 = scmp.ne.s32.totalorder %s118, %s120
      %p124 = scmp.eq.s32.totalorder %s16, 0
      %p125 = por %p123, %p124
      %p126 = scmp.ne.s32.totalorder %s118, %s120
      %p127 = scmp.eq.s32.totalorder %s21, 1
      %p128 = por %p126, %p127
      %p129 = scmp.ne.s32.totalorder %s120, %s121
      %p130 = scmp.eq.s32.totalorder %s21, 0
      %p131 = por %p129, %p130
      %p132 = scmp.ne.s32.totalorder %s120, %s121
      %p133 = scmp.eq.s32.totalorder %s22, 1
      %p134 = por %p132, %p133
      %p136 = scmp.ne.s32.totalorder %s121, %s135
      %p137 = scmp.eq.s32.totalorder %s22, 0
      %p138 = por %p136, %p137
      %s139 = ssub.s32 %s16, %s23
      %p140 = scmp.eq.s32.totalorder %s139, 0
      %s142 = sadd.s32 %s141, 1
      %s143 = scalar_select %p140, %s141, %s142
      %p146 = pneg %p140
      %p147 = scmp.eq.s32.totalorder %s16, 1
      %p148 = por %p146, %p147
      %p149 = scmp.ne.s32.totalorder %s141, %s144
      %p150 = scmp.eq.s32.totalorder %s16, 0
      %p151 = por %p149, %p150
      %p152 = scmp.ne.s32.totalorder %s141, %s144
      %p153 = scmp.eq.s32.totalorder %s21, 1
      %p154 = por %p152, %p153
      %p155 = scmp.ne.s32.totalorder %s144, %s145
      %p156 = scmp.eq.s32.totalorder %s21, 0
      %p157 = por %p155, %p156
      %p158 = scmp.ne.s32.totalorder %s144, %s145
      %p159 = scmp.eq.s32.totalorder %s22, 1
      %p160 = por %p158, %p159
      %p162 = scmp.ne.s32.totalorder %s145, %s161
      %p163 = scmp.eq.s32.totalorder %s22, 0
      %p164 = por %p162, %p163
      %s165 = ssub.s32 %s16, %s23
      %p166 = scmp.eq.s32.totalorder %s165, 0
      %s168 = sadd.s32 %s167, 1
      %s169 = scalar_select %p166, %s167, %s168
      %p172 = pneg %p166
      %p173 = scmp.eq.s32.totalorder %s16, 1
      %p174 = por %p172, %p173
      %p175 = scmp.ne.s32.totalorder %s167, %s170
      %p176 = scmp.eq.s32.totalorder %s16, 0
      %p177 = por %p175, %p176
      %p178 = scmp.ne.s32.totalorder %s167, %s170
      %p179 = scmp.eq.s32.totalorder %s21, 1
      %p180 = por %p178, %p179
      %p181 = scmp.ne.s32.totalorder %s170, %s171
      %p182 = scmp.eq.s32.totalorder %s21, 0
      %p183 = por %p181, %p182
      %p184 = scmp.ne.s32.totalorder %s170, %s171
      %p185 = scmp.eq.s32.totalorder %s22, 1
      %p186 = por %p184, %p185
      %p188 = scmp.ne.s32.totalorder %s171, %s187
      %p189 = scmp.eq.s32.totalorder %s22, 0
      %p190 = por %p188, %p189
      %p191 = scmp.le.s32.totalorder 1, %s16
      %p192 = scmp.lt.s32.totalorder %s16, 3
      %p193 = pnand %p191, %p192
      %p194 = pneg %p193
      // Predicated region
      $region9: #{agent_weighting_forward.1} parent=5 // pred_check
        _
      $region10: #{agent_weighting_forward.1} parent=5 // pred_check_branch
        %196 = sbr.rel (%p193) target = $region12
      $region11: #{agent_weighting_forward.1} parent=5 // pred_region
        %s197 = ssub.s32 %s16, 1
        // Predicated region
        $region13: #{agent_weighting_forward.1} parent=11 // pred_check
          %p198 = pneg %p89
        $region14: #{agent_weighting_forward.1} parent=11 // pred_check_branch
          %200 = sbr.rel (%p198) target = $region16
        $region15: #{agent_weighting_forward.1} parent=11 // pred_region
          _
        $region16: #{agent_weighting_forward.1} parent=11 // pred_fallthru
          _
        // Predicated region
        $region17: #{agent_weighting_forward.1} parent=11 // pred_check
          %p201 = pneg %p110
        $region18: #{agent_weighting_forward.1} parent=11 // pred_check_branch
          %203 = sbr.rel (%p201) target = $region20
        $region19: #{agent_weighting_forward.1} parent=11 // pred_region
          _
        $region20: #{agent_weighting_forward.1} parent=11 // pred_fallthru
          _
        // Predicated region
        $region21: #{agent_weighting_forward.1} parent=11 // pred_check
          %p204 = pneg %p131
        $region22: #{agent_weighting_forward.1} parent=11 // pred_check_branch
          %206 = sbr.rel (%p204) target = $region24
        $region23: #{agent_weighting_forward.1} parent=11 // pred_region
          _
        $region24: #{agent_weighting_forward.1} parent=11 // pred_fallthru
          _
      $region12: #{agent_weighting_forward.1} parent=5 // pred_fallthru
        _
      %p207 = scmp.lt.s32.totalorder %s16, 2
      // Predicated region
      $region25: #{agent_weighting_forward.1} parent=5 // pred_check
        %p208 = pneg %p207
      $region26: #{agent_weighting_forward.1} parent=5 // pred_check_branch
        %210 = sbr.rel (%p208) target = $region28
      $region27: #{agent_weighting_forward.1} parent=5 // pred_region
        // Predicated region
        $region29: #{agent_weighting_forward.1} parent=27 // pred_check
          %p211 = pneg %p36
        $region30: #{agent_weighting_forward.1} parent=27 // pred_check_branch
          %213 = sbr.rel (%p211) target = $region32
        $region31: #{agent_weighting_forward.1} parent=27 // pred_region
          %s214 = sand.u32 %s26, 1
          %s215 = sand.u32 %s26, 1
          %s216 = smul.addr %s215, 80
          %s217 = scalar_lea.vmem [#allocation2], %s216
          %s218 = smul.addr %s16, 2
          %s219 = smul.addr %s218, 8
          %s220 = scalar_lea.vmem %s0, %s219
          // Predicated region
          $region33: #{agent_weighting_forward.1} parent=31 // pred_check
            _
          $region34: #{agent_weighting_forward.1} parent=31 // pred_check_branch
            %222 = sbr.rel (0) target = $region36
          $region35: #{agent_weighting_forward.1} parent=31 // pred_region
            // Predicated region
            $region37: #{agent_weighting_forward.1} parent=35 // pred_check
              _
            $region38: #{agent_weighting_forward.1} parent=35 // pred_check_branch
              %224 = sbr.rel (0) target = $region40
            $region39: #{agent_weighting_forward.1} parent=35 // pred_region
              loop: start=0, step=1, limit=1
              $region41: #{agent_weighting_forward.1} parent=39 // loop_pre_header
                _
              $region42: #{agent_weighting_forward.1} parent=39 // loop_header
                %s226 = sphi 0, %s230
                %p227 = scmp.ge.s32.totalorder %s226, 1
                %s231 = sphi %s220, %s220
                %s232 = sphi %s217, %s217
              $region43: #{agent_weighting_forward.1} parent=39 // loop_header_branch
                %229 = sbr.rel (%p227) target = $region47
              $region44: #{agent_weighting_forward.1} parent=39 // loop_body
                %v233 = vld [vmem:[%s231] sm:$0xff]
                %234 = vst [vmem:[%s232] sm:$0xff] %v233
                %v235 = vld [vmem:[%s231 + $0x8] sm:$0xff]
                %236 = vst [vmem:[%s232 + $0x8] sm:$0xff] %v235
                %v237 = vld [vmem:[%s231 + $0x20] sm:$0xff]
                %238 = vst [vmem:[%s232 + $0x10] sm:$0xff] %v237
                %v239 = vld [vmem:[%s231 + $0x28] sm:$0xff]
                %240 = vst [vmem:[%s232 + $0x18] sm:$0xff] %v239
                %v241 = vld [vmem:[%s231 + $0x40] sm:$0xff]
                %242 = vst [vmem:[%s232 + $0x20] sm:$0xff] %v241
                %v243 = vld [vmem:[%s231 + $0x48] sm:$0xff]
                %244 = vst [vmem:[%s232 + $0x28] sm:$0xff] %v243
                %v245 = vld [vmem:[%s231 + $0x60] sm:$0xff]
                %246 = vst [vmem:[%s232 + $0x30] sm:$0xff] %v245
                %v247 = vld [vmem:[%s231 + $0x68] sm:$0xff]
                %248 = vst [vmem:[%s232 + $0x38] sm:$0xff] %v247
                %v249 = vld [vmem:[%s231 + $0x80] sm:$0xff]
                %250 = vst [vmem:[%s232 + $0x40] sm:$0xff] %v249
                %v251 = vld [vmem:[%s231 + $0x88] sm:$0xff]
                %252 = vst [vmem:[%s232 + $0x48] sm:$0xff] %v251
              $region45: #{agent_weighting_forward.1} parent=39 // loop_footer
                %s230 = sadd.s32 1, %s226
              $region46: #{agent_weighting_forward.1} parent=39 // loop_footer_branch
                %225 = sbr.rel target = $region42
              $region47: #{agent_weighting_forward.1} parent=39 // loop_exit
                _
            $region40: #{agent_weighting_forward.1} parent=35 // pred_fallthru
              _
            // Predicated region
            $region48: #{agent_weighting_forward.1} parent=35 // pred_check
              _
            $region49: #{agent_weighting_forward.1} parent=35 // pred_check_branch
              %254 = sbr.rel target = $region51
            $region50: #{agent_weighting_forward.1} parent=35 // pred_region
              _
            $region51: #{agent_weighting_forward.1} parent=35 // pred_fallthru
              _
          $region36: #{agent_weighting_forward.1} parent=31 // pred_fallthru
            _
          %255 = vnop
        $region32: #{agent_weighting_forward.1} parent=27 // pred_fallthru
          _
        // Predicated region
        $region52: #{agent_weighting_forward.1} parent=27 // pred_check
          %p256 = pneg %p62
        $region53: #{agent_weighting_forward.1} parent=27 // pred_check_branch
          %258 = sbr.rel (%p256) target = $region55
        $region54: #{agent_weighting_forward.1} parent=27 // pred_region
          %p259 = scmp.lt.s32.totalorder %s16, 1
          %s260 = scalar_select %p259, %s16, 1
          %s261 = smul.addr %s260, 8
          %s262 = scalar_lea.vmem %s1, %s261
        $region55: #{agent_weighting_forward.1} parent=27 // pred_fallthru
          _
      $region28: #{agent_weighting_forward.1} parent=5 // pred_fallthru
        _
      %p263 = scmp.le.s32.totalorder 1, %s16
      %p264 = scmp.lt.s32.totalorder %s16, 3
      %p265 = pnand %p263, %p264
      %p266 = pneg %p265
      // Predicated region
      $region56: #{agent_weighting_forward.1} parent=5 // pred_check
        _
      $region57: #{agent_weighting_forward.1} parent=5 // pred_check_branch
        %268 = sbr.rel (%p265) target = $region59
      $region58: #{agent_weighting_forward.1} parent=5 // pred_region
        %s269 = ssub.s32 %s16, 1
        %s270 = sand.u32 %s29, 1
        %s271 = sand.u32 %s29, 1
        %s272 = smul.addr %s271, 80
        %s273 = scalar_lea.vmem [#allocation2], %s272
        // Predicated region
        $region60: #{agent_weighting_forward.1} parent=58 // pred_check
          %p274 = pneg %p42
        $region61: #{agent_weighting_forward.1} parent=58 // pred_check_branch
          %276 = sbr.rel (%p274) target = $region63
        $region62: #{agent_weighting_forward.1} parent=58 // pred_region
          _
        $region63: #{agent_weighting_forward.1} parent=58 // pred_fallthru
          _
        %s277 = sand.u32 %s29, 1
        %s278 = sand.u32 %s29, 1
        %s279 = smul.addr %s278, 80
        %s280 = scalar_lea.vmem [#allocation2], %s279
        %p281 = pneg %p42
        %p282 = pneg %p39
        %p283 = scmp.lt.s32.totalorder %s21, 1
        %s284 = scalar_select %p283, %s21, 1
        %s285 = smul.addr %s284, 8
        %s286 = scalar_lea.vmem %s1, %s285
        %p287 = pneg %p68
        %p288 = pneg %p65
        %p289 = pneg %p89
        %p290 = pneg %p86
        %p291 = pneg %p110
        %p292 = pneg %p107
        %p293 = pneg %p131
        %p294 = pneg %p128
        %p295 = pneg %p157
        %p296 = pneg %p154
        %s297 = sand.u32 %s144, 1
        %s298 = scalar_lea.sflag [#allocation4], %s297
        %s299 = sand.u32 %s144, 1
        %s300 = smul.addr %s299, 16
        %s301 = scalar_lea.vmem [#allocation3], %s300
        %p302 = pneg %p183
        %p303 = pneg %p180
        %p304 = scmp.lt.s32.totalorder %s21, 1
        %s305 = scalar_select %p304, %s21, 1
        %s306 = smul.addr %s305, 8
        %s307 = scalar_lea.vmem %s6, %s306
        %p308 = scmp.lt.s32.totalorder %s21, 1
        %s309 = scalar_select %p308, %s21, 1
        %s310 = smul.addr %s309, 8
        %s311 = scalar_lea.vmem %s1, %s310
        %p312 = scmp.lt.s32.totalorder %s21, 1
        %s313 = scalar_select %p312, %s21, 1
        %s314 = smul.addr %s313, 8
        %s315 = scalar_lea.vmem %s6, %s314
        %v316 = vld [vmem:[%s2] sm:$0xff]
        %v317 = vld [vmem:[%s2 + $0x8] sm:$0xff]
        %v318 = vld [vmem:[%s2 + $0x10] sm:$0xff]
        %v319 = vld [vmem:[%s2 + $0x18] sm:$0xff]
        %v320 = vld [vmem:[%s2 + $0x20] sm:$0xff]
        %v321 = vld [vmem:[%s2 + $0x28] sm:$0xff]
        %v322 = vld [vmem:[%s2 + $0x30] sm:$0xff]
        %v323 = vld [vmem:[%s2 + $0x38] sm:$0xff]
        %v324 = vld [vmem:[%s2 + $0x40] sm:$0xff]
        %v325 = vld [vmem:[%s2 + $0x48] sm:$0xff]
        %v326 = vld [vmem:[%s2 + $0x50] sm:$0xff]
        %v327 = vld [vmem:[%s2 + $0x58] sm:$0xff]
        %v328 = vld [vmem:[%s2 + $0x60] sm:$0xff]
        %v329 = vld [vmem:[%s2 + $0x68] sm:$0xff]
        %v330 = vld [vmem:[%s2 + $0x70] sm:$0xff]
        %v331 = vld [vmem:[%s2 + $0x78] sm:$0xff]
        %v332 = vld [vmem:[%s2 + $0x80] sm:$0xff]
        %v333 = vld [vmem:[%s2 + $0x88] sm:$0xff]
        %v334 = vld [vmem:[%s2 + $0x90] sm:$0xff]
        %v335 = vld [vmem:[%s2 + $0x98] sm:$0xff]
        %v336 = vld [vmem:[%s2 + $0xa0] sm:$0xff]
        %v337 = vld [vmem:[%s2 + $0xa8] sm:$0xff]
        %v338 = vld [vmem:[%s2 + $0xb0] sm:$0xff]
        %v339 = vld [vmem:[%s2 + $0xb8] sm:$0xff]
        %v340 = vld [vmem:[%s2 + $0xc0] sm:$0xff]
        %v341 = vld [vmem:[%s2 + $0xc8] sm:$0xff]
        %v342 = vld [vmem:[%s2 + $0xd0] sm:$0xff]
        %v343 = vld [vmem:[%s2 + $0xd8] sm:$0xff]
        %v344 = vld [vmem:[%s2 + $0xe0] sm:$0xff]
        %v345 = vld [vmem:[%s2 + $0xe8] sm:$0xff]
        %v346 = vld [vmem:[%s2 + $0xf0] sm:$0xff]
        %v347 = vld [vmem:[%s2 + $0xf8] sm:$0xff]
        %v348 = vld [vmem:[%s3] sm:$0xff]
        %v349 = vld [vmem:[%s3 + $0x8] sm:$0xff]
        %v350 = vld [vmem:[%s3 + $0x10] sm:$0xff]
        %v351 = vld [vmem:[%s3 + $0x18] sm:$0xff]
        %v352 = vld [vmem:[%s3 + $0x20] sm:$0xff]
        %v353 = vld [vmem:[%s3 + $0x28] sm:$0xff]
        %v354 = vld [vmem:[%s3 + $0x30] sm:$0xff]
        %v355 = vld [vmem:[%s3 + $0x38] sm:$0xff]
        %v356 = vld [vmem:[%s3 + $0x40] sm:$0xff]
        %v357 = vld [vmem:[%s3 + $0x48] sm:$0xff]
        %v358 = vld [vmem:[%s3 + $0x50] sm:$0xff]
        %v359 = vld [vmem:[%s3 + $0x58] sm:$0xff]
        %v360 = vld [vmem:[%s3 + $0x60] sm:$0xff]
        %v361 = vld [vmem:[%s3 + $0x68] sm:$0xff]
        %v362 = vld [vmem:[%s3 + $0x70] sm:$0xff]
        %v363 = vld [vmem:[%s3 + $0x78] sm:$0xff]
        %v364 = vld [vmem:[%s4] sm:$0xff]
        %v365 = vld [vmem:[%s311] sm:$0xff]
        %s366 = smul.u32 %s21, 8
        %v367 = vlaneseq
        %v368 = vshrl.u32 %v367, 7
        %v369 = vstv %s366
        %v370 = vadd.s32 %v369, %v368
        %vm371 = vcmp.lt.s32.totalorder %v370, 12
        %v372 = vlaneseq
        %v373 = vand.u32 %v372, 127
        %v374 = vld [vmem:[%s273] sm:$0xff]
        %v375 = vld [vmem:[%s273 + $0x8] sm:$0xff]
        %377 = vset.pattern.permute.xlu0 0
        %378 = vperm.xlu0 %377, %v365
        %v379 = vpop.permute.xlu0 %378
        %v381 = vperm.slane %v364, 0
        %v382 = vmul.f32 %v379, %v381
        %383 = vmatpush.msra.mxu0 %v331
        %384 = vmatpush.msra.mxu0 %v330
        %385 = vmatpush.msra.mxu0 %v329
        %386 = vmatpush.msra.mxu0 %v328
        %387 = vmatpush.msra.mxu0 %v327
        %388 = vmatpush.msra.mxu0 %v326
        %389 = vmatpush.msra.mxu0 %v325
        %390 = vmatpush.msra.mxu0 %v324
        %391 = vmatpush.msra.mxu0 %v323
        %392 = vmatpush.msra.mxu0 %v322
        %393 = vmatpush.msra.mxu0 %v321
        %394 = vmatpush.msra.mxu0 %v320
        %395 = vmatpush.msra.mxu0 %v319
        %396 = vmatpush.msra.mxu0 %v318
        %397 = vmatpush.msra.mxu0 %v317
        %398 = vmatpush.msra.mxu0 %v316
        %399 = vmatmul.f32.gmra.mxu0 %v374
        %v400 = vpop.f32.mrf.mxu0
        %v401 = vadd.f32 %v382, %v400
        %402 = vdwg.mxu0
        %403 = vmatpush.msra.mxu0 %v347
        %404 = vmatpush.msra.mxu0 %v346
        %405 = vmatpush.msra.mxu0 %v345
        %406 = vmatpush.msra.mxu0 %v344
        %407 = vmatpush.msra.mxu0 %v343
        %408 = vmatpush.msra.mxu0 %v342
        %409 = vmatpush.msra.mxu0 %v341
        %410 = vmatpush.msra.mxu0 %v340
        %411 = vmatpush.msra.mxu0 %v339
        %412 = vmatpush.msra.mxu0 %v338
        %413 = vmatpush.msra.mxu0 %v337
        %414 = vmatpush.msra.mxu0 %v336
        %415 = vmatpush.msra.mxu0 %v335
        %416 = vmatpush.msra.mxu0 %v334
        %417 = vmatpush.msra.mxu0 %v333
        %418 = vmatpush.msra.mxu0 %v332
        %419 = vmatmul.f32.gmra.mxu0 %v375
        %v420 = vpop.f32.mrf.mxu0
        %v421 = vadd.f32 %v401, %v420
        %422 = vdwg.mxu0
        %v423 = vperm.slane %v364, 1
        %v424 = vadd.f32 %v421, %v423
        %v425 = vmax.f32 %v424, 0.0
        %v426 = vperm.slane %v364, 2
        %427 = vmatpush.msra.mxu0 %v363
        %428 = vmatpush.msra.mxu0 %v362
        %429 = vmatpush.msra.mxu0 %v361
        %430 = vmatpush.msra.mxu0 %v360
        %431 = vmatpush.msra.mxu0 %v359
        %432 = vmatpush.msra.mxu0 %v358
        %433 = vmatpush.msra.mxu0 %v357
        %434 = vmatpush.msra.mxu0 %v356
        %435 = vmatpush.msra.mxu0 %v355
        %436 = vmatpush.msra.mxu0 %v354
        %437 = vmatpush.msra.mxu0 %v353
        %438 = vmatpush.msra.mxu0 %v352
        %439 = vmatpush.msra.mxu0 %v351
        %440 = vmatpush.msra.mxu0 %v350
        %441 = vmatpush.msra.mxu0 %v349
        %442 = vmatpush.msra.mxu0 %v348
        %443 = vmatmul.f32.gmra.mxu0 %v425
        %v444 = vpop.f32.mrf.mxu0
        %v445 = vadd.f32 %v426, %v444
        %446 = vdwg.mxu0
        %v447 = vmax.f32 %v445, 0.0
        %v448 = vperm.slane %v364, 3
        %v449 = vmul.f32 %v447, %v448
        %vm450 = vcmask 523264
        %v451 = vsel %vm450, %v449, 0.0
        %452 = vadd.xlane.f32.xlu0 %v451
        %v453 = vpop.xlane.xlu0 %452
        %v454 = vperm.slane %v364, 4
        %v455 = vadd.f32 %v453, %v454
        %v456 = vxor.u32 %v455, 2147483648
        %v457 = vmul.f32 %v456, 1.442695
        %v458 = vpow.pop %v457
        %v459 = vadd.f32 %v458, 1.0
        %v460 = vrcp.pop %v459
        %v461 = vmul.f32 %v459, %v460
        %v462 = vsub.f32 1.0, %v461
        %v463 = vmul.f32 %v460, %v462
        %v464 = vadd.f32 %v460, %v463
        %vm465 = vweird.f32 %v459
        %vm466 = vweird.f32 %v460
        %vm467 = vmor %vm465, %vm466
        %v468 = vsel %vm467, %v460, %v464
        %v469 = vand.u32 2147483647, %v459
        %vm470 = vcmp.eq.f32.partialorder %v469, 8.507059e+37
        %v471 = vand.u32 %v459, 2147483648
        %v472 = vor.u32 1.1754944e-38, %v471
        %v473 = vsel %vm470, %v472, %v468
        %v474 = vmul.f32 1.0, %v473
        %v475 = vsel %vm371, %v474, 0.0
        %477 = vset.pattern.permute.xlu0 0
        %478 = vperm.xlu0 %477, %v475
        %v479 = vpop.permute.xlu0 %478
        %v481 = vmul.f32 %v479, %v374
        %v482 = vmul.f32 %v479, %v375
        %v483 = vadd.f32 %v481, 0.0
        %v484 = vadd.f32 %v482, 0.0
        %vm485 = vcmp.eq.s32.totalorder %v373, 0
        %v486 = vsel %vm485, %v479, 0.0
        %s487 = scalar_lea.vmem %s273, 16 [#allocation2]
        %v488 = vld [vmem:[%s487] sm:$0xff]
        %v489 = vld [vmem:[%s487 + $0x8] sm:$0xff]
        %490 = vset.pattern.permute.xlu0 1
        %491 = vperm.xlu0 %490, %v365
        %v492 = vpop.permute.xlu0 %491
        %v494 = vmul.f32 %v492, %v381
        %495 = vmatpush.msra.mxu0 %v331
        %496 = vmatpush.msra.mxu0 %v330
        %497 = vmatpush.msra.mxu0 %v329
        %498 = vmatpush.msra.mxu0 %v328
        %499 = vmatpush.msra.mxu0 %v327
        %500 = vmatpush.msra.mxu0 %v326
        %501 = vmatpush.msra.mxu0 %v325
        %502 = vmatpush.msra.mxu0 %v324
        %503 = vmatpush.msra.mxu0 %v323
        %504 = vmatpush.msra.mxu0 %v322
        %505 = vmatpush.msra.mxu0 %v321
        %506 = vmatpush.msra.mxu0 %v320
        %507 = vmatpush.msra.mxu0 %v319
        %508 = vmatpush.msra.mxu0 %v318
        %509 = vmatpush.msra.mxu0 %v317
        %510 = vmatpush.msra.mxu0 %v316
        %511 = vmatmul.f32.gmra.mxu0 %v488
        %v512 = vpop.f32.mrf.mxu0
        %v513 = vadd.f32 %v494, %v512
        %514 = vdwg.mxu0
        %515 = vmatpush.msra.mxu0 %v347
        %516 = vmatpush.msra.mxu0 %v346
        %517 = vmatpush.msra.mxu0 %v345
        %518 = vmatpush.msra.mxu0 %v344
        %519 = vmatpush.msra.mxu0 %v343
        %520 = vmatpush.msra.mxu0 %v342
        %521 = vmatpush.msra.mxu0 %v341
        %522 = vmatpush.msra.mxu0 %v340
        %523 = vmatpush.msra.mxu0 %v339
        %524 = vmatpush.msra.mxu0 %v338
        %525 = vmatpush.msra.mxu0 %v337
        %526 = vmatpush.msra.mxu0 %v336
        %527 = vmatpush.msra.mxu0 %v335
        %528 = vmatpush.msra.mxu0 %v334
        %529 = vmatpush.msra.mxu0 %v333
        %530 = vmatpush.msra.mxu0 %v332
        %531 = vmatmul.f32.gmra.mxu0 %v489
        %v532 = vpop.f32.mrf.mxu0
        %v533 = vadd.f32 %v513, %v532
        %534 = vdwg.mxu0
        %v535 = vadd.f32 %v533, %v423
        %v536 = vmax.f32 %v535, 0.0
        %537 = vmatpush.msra.mxu0 %v363
        %538 = vmatpush.msra.mxu0 %v362
        %539 = vmatpush.msra.mxu0 %v361
        %540 = vmatpush.msra.mxu0 %v360
        %541 = vmatpush.msra.mxu0 %v359
        %542 = vmatpush.msra.mxu0 %v358
        %543 = vmatpush.msra.mxu0 %v357
        %544 = vmatpush.msra.mxu0 %v356
        %545 = vmatpush.msra.mxu0 %v355
        %546 = vmatpush.msra.mxu0 %v354
        %547 = vmatpush.msra.mxu0 %v353
        %548 = vmatpush.msra.mxu0 %v352
        %549 = vmatpush.msra.mxu0 %v351
        %550 = vmatpush.msra.mxu0 %v350
        %551 = vmatpush.msra.mxu0 %v349
        %552 = vmatpush.msra.mxu0 %v348
        %553 = vmatmul.f32.gmra.mxu0 %v536
        %v554 = vpop.f32.mrf.mxu0
        %v555 = vadd.f32 %v426, %v554
        %556 = vdwg.mxu0
        %v557 = vmax.f32 %v555, 0.0
        %v558 = vmul.f32 %v557, %v448
        %v559 = vsel %vm450, %v558, 0.0
        %560 = vadd.xlane.f32.xlu0 %v559
        %v561 = vpop.xlane.xlu0 %560
        %v562 = vadd.f32 %v561, %v454
        %v563 = vxor.u32 %v562, 2147483648
        %v564 = vmul.f32 %v563, 1.442695
        %v565 = vpow.pop %v564
        %v566 = vadd.f32 %v565, 1.0
        %v567 = vrcp.pop %v566
        %v568 = vmul.f32 %v566, %v567
        %v569 = vsub.f32 1.0, %v568
        %v570 = vmul.f32 %v567, %v569
        %v571 = vadd.f32 %v567, %v570
        %vm572 = vweird.f32 %v566
        %vm573 = vweird.f32 %v567
        %vm574 = vmor %vm572, %vm573
        %v575 = vsel %vm574, %v567, %v571
        %v576 = vand.u32 2147483647, %v566
        %vm577 = vcmp.eq.f32.partialorder %v576, 8.507059e+37
        %v578 = vand.u32 %v566, 2147483648
        %v579 = vor.u32 1.1754944e-38, %v578
        %v580 = vsel %vm577, %v579, %v575
        %v581 = vmul.f32 1.0, %v580
        %v582 = vsel %vm371, %v581, 0.0
        %584 = vset.pattern.permute.xlu0 0
        %585 = vperm.xlu0 %584, %v582
        %v586 = vpop.permute.xlu0 %585
        %v588 = vmul.f32 %v586, %v488
        %v589 = vmul.f32 %v586, %v489
        %v590 = vadd.f32 %v483, %v588
        %v591 = vadd.f32 %v484, %v589
        %vm592 = vcmp.eq.s32.totalorder %v373, 1
        %v593 = vsel %vm592, %v586, %v486
        %s594 = scalar_lea.vmem %s273, 32 [#allocation2]
        %v595 = vld [vmem:[%s594] sm:$0xff]
        %v596 = vld [vmem:[%s594 + $0x8] sm:$0xff]
        %597 = vset.pattern.permute.xlu0 2
        %598 = vperm.xlu0 %597, %v365
        %v599 = vpop.permute.xlu0 %598
        %v601 = vmul.f32 %v599, %v381
        %602 = vmatpush.msra.mxu0 %v331
        %603 = vmatpush.msra.mxu0 %v330
        %604 = vmatpush.msra.mxu0 %v329
        %605 = vmatpush.msra.mxu0 %v328
        %606 = vmatpush.msra.mxu0 %v327
        %607 = vmatpush.msra.mxu0 %v326
        %608 = vmatpush.msra.mxu0 %v325
        %609 = vmatpush.msra.mxu0 %v324
        %610 = vmatpush.msra.mxu0 %v323
        %611 = vmatpush.msra.mxu0 %v322
        %612 = vmatpush.msra.mxu0 %v321
        %613 = vmatpush.msra.mxu0 %v320
        %614 = vmatpush.msra.mxu0 %v319
        %615 = vmatpush.msra.mxu0 %v318
        %616 = vmatpush.msra.mxu0 %v317
        %617 = vmatpush.msra.mxu0 %v316
        %618 = vmatmul.f32.gmra.mxu0 %v595
        %v619 = vpop.f32.mrf.mxu0
        %v620 = vadd.f32 %v601, %v619
        %621 = vdwg.mxu0
        %622 = vmatpush.msra.mxu0 %v347
        %623 = vmatpush.msra.mxu0 %v346
        %624 = vmatpush.msra.mxu0 %v345
        %625 = vmatpush.msra.mxu0 %v344
        %626 = vmatpush.msra.mxu0 %v343
        %627 = vmatpush.msra.mxu0 %v342
        %628 = vmatpush.msra.mxu0 %v341
        %629 = vmatpush.msra.mxu0 %v340
        %630 = vmatpush.msra.mxu0 %v339
        %631 = vmatpush.msra.mxu0 %v338
        %632 = vmatpush.msra.mxu0 %v337
        %633 = vmatpush.msra.mxu0 %v336
        %634 = vmatpush.msra.mxu0 %v335
        %635 = vmatpush.msra.mxu0 %v334
        %636 = vmatpush.msra.mxu0 %v333
        %637 = vmatpush.msra.mxu0 %v332
        %638 = vmatmul.f32.gmra.mxu0 %v596
        %v639 = vpop.f32.mrf.mxu0
        %v640 = vadd.f32 %v620, %v639
        %641 = vdwg.mxu0
        %v642 = vadd.f32 %v640, %v423
        %v643 = vmax.f32 %v642, 0.0
        %644 = vmatpush.msra.mxu0 %v363
        %645 = vmatpush.msra.mxu0 %v362
        %646 = vmatpush.msra.mxu0 %v361
        %647 = vmatpush.msra.mxu0 %v360
        %648 = vmatpush.msra.mxu0 %v359
        %649 = vmatpush.msra.mxu0 %v358
        %650 = vmatpush.msra.mxu0 %v357
        %651 = vmatpush.msra.mxu0 %v356
        %652 = vmatpush.msra.mxu0 %v355
        %653 = vmatpush.msra.mxu0 %v354
        %654 = vmatpush.msra.mxu0 %v353
        %655 = vmatpush.msra.mxu0 %v352
        %656 = vmatpush.msra.mxu0 %v351
        %657 = vmatpush.msra.mxu0 %v350
        %658 = vmatpush.msra.mxu0 %v349
        %659 = vmatpush.msra.mxu0 %v348
        %660 = vmatmul.f32.gmra.mxu0 %v643
        %v661 = vpop.f32.mrf.mxu0
        %v662 = vadd.f32 %v426, %v661
        %663 = vdwg.mxu0
        %v664 = vmax.f32 %v662, 0.0
        %v665 = vmul.f32 %v664, %v448
        %v666 = vsel %vm450, %v665, 0.0
        %667 = vadd.xlane.f32.xlu0 %v666
        %v668 = vpop.xlane.xlu0 %667
        %v669 = vadd.f32 %v668, %v454
        %v670 = vxor.u32 %v669, 2147483648
        %v671 = vmul.f32 %v670, 1.442695
        %v672 = vpow.pop %v671
        %v673 = vadd.f32 %v672, 1.0
        %v674 = vrcp.pop %v673
        %v675 = vmul.f32 %v673, %v674
        %v676 = vsub.f32 1.0, %v675
        %v677 = vmul.f32 %v674, %v676
        %v678 = vadd.f32 %v674, %v677
        %vm679 = vweird.f32 %v673
        %vm680 = vweird.f32 %v674
        %vm681 = vmor %vm679, %vm680
        %v682 = vsel %vm681, %v674, %v678
        %v683 = vand.u32 2147483647, %v673
        %vm684 = vcmp.eq.f32.partialorder %v683, 8.507059e+37
        %v685 = vand.u32 %v673, 2147483648
        %v686 = vor.u32 1.1754944e-38, %v685
        %v687 = vsel %vm684, %v686, %v682
        %v688 = vmul.f32 1.0, %v687
        %v689 = vsel %vm371, %v688, 0.0
        %691 = vset.pattern.permute.xlu0 0
        %692 = vperm.xlu0 %691, %v689
        %v693 = vpop.permute.xlu0 %692
        %v695 = vmul.f32 %v693, %v595
        %v696 = vmul.f32 %v693, %v596
        %v697 = vadd.f32 %v590, %v695
        %v698 = vadd.f32 %v591, %v696
        %vm699 = vcmp.eq.s32.totalorder %v373, 2
        %v700 = vsel %vm699, %v693, %v593
        %s701 = scalar_lea.vmem %s273, 48 [#allocation2]
        %v702 = vld [vmem:[%s701] sm:$0xff]
        %v703 = vld [vmem:[%s701 + $0x8] sm:$0xff]
        %704 = vset.pattern.permute.xlu0 3
        %705 = vperm.xlu0 %704, %v365
        %v706 = vpop.permute.xlu0 %705
        %v708 = vmul.f32 %v706, %v381
        %709 = vmatpush.msra.mxu0 %v331
        %710 = vmatpush.msra.mxu0 %v330
        %711 = vmatpush.msra.mxu0 %v329
        %712 = vmatpush.msra.mxu0 %v328
        %713 = vmatpush.msra.mxu0 %v327
        %714 = vmatpush.msra.mxu0 %v326
        %715 = vmatpush.msra.mxu0 %v325
        %716 = vmatpush.msra.mxu0 %v324
        %717 = vmatpush.msra.mxu0 %v323
        %718 = vmatpush.msra.mxu0 %v322
        %719 = vmatpush.msra.mxu0 %v321
        %720 = vmatpush.msra.mxu0 %v320
        %721 = vmatpush.msra.mxu0 %v319
        %722 = vmatpush.msra.mxu0 %v318
        %723 = vmatpush.msra.mxu0 %v317
        %724 = vmatpush.msra.mxu0 %v316
        %725 = vmatmul.f32.gmra.mxu0 %v702
        %v726 = vpop.f32.mrf.mxu0
        %v727 = vadd.f32 %v708, %v726
        %728 = vdwg.mxu0
        %729 = vmatpush.msra.mxu0 %v347
        %730 = vmatpush.msra.mxu0 %v346
        %731 = vmatpush.msra.mxu0 %v345
        %732 = vmatpush.msra.mxu0 %v344
        %733 = vmatpush.msra.mxu0 %v343
        %734 = vmatpush.msra.mxu0 %v342
        %735 = vmatpush.msra.mxu0 %v341
        %736 = vmatpush.msra.mxu0 %v340
        %737 = vmatpush.msra.mxu0 %v339
        %738 = vmatpush.msra.mxu0 %v338
        %739 = vmatpush.msra.mxu0 %v337
        %740 = vmatpush.msra.mxu0 %v336
        %741 = vmatpush.msra.mxu0 %v335
        %742 = vmatpush.msra.mxu0 %v334
        %743 = vmatpush.msra.mxu0 %v333
        %744 = vmatpush.msra.mxu0 %v332
        %745 = vmatmul.f32.gmra.mxu0 %v703
        %v746 = vpop.f32.mrf.mxu0
        %v747 = vadd.f32 %v727, %v746
        %748 = vdwg.mxu0
        %v749 = vadd.f32 %v747, %v423
        %v750 = vmax.f32 %v749, 0.0
        %751 = vmatpush.msra.mxu0 %v363
        %752 = vmatpush.msra.mxu0 %v362
        %753 = vmatpush.msra.mxu0 %v361
        %754 = vmatpush.msra.mxu0 %v360
        %755 = vmatpush.msra.mxu0 %v359
        %756 = vmatpush.msra.mxu0 %v358
        %757 = vmatpush.msra.mxu0 %v357
        %758 = vmatpush.msra.mxu0 %v356
        %759 = vmatpush.msra.mxu0 %v355
        %760 = vmatpush.msra.mxu0 %v354
        %761 = vmatpush.msra.mxu0 %v353
        %762 = vmatpush.msra.mxu0 %v352
        %763 = vmatpush.msra.mxu0 %v351
        %764 = vmatpush.msra.mxu0 %v350
        %765 = vmatpush.msra.mxu0 %v349
        %766 = vmatpush.msra.mxu0 %v348
        %767 = vmatmul.f32.gmra.mxu0 %v750
        %v768 = vpop.f32.mrf.mxu0
        %v769 = vadd.f32 %v426, %v768
        %770 = vdwg.mxu0
        %v771 = vmax.f32 %v769, 0.0
        %v772 = vmul.f32 %v771, %v448
        %v773 = vsel %vm450, %v772, 0.0
        %774 = vadd.xlane.f32.xlu0 %v773
        %v775 = vpop.xlane.xlu0 %774
        %v776 = vadd.f32 %v775, %v454
        %v777 = vxor.u32 %v776, 2147483648
        %v778 = vmul.f32 %v777, 1.442695
        %v779 = vpow.pop %v778
        %v780 = vadd.f32 %v779, 1.0
        %v781 = vrcp.pop %v780
        %v782 = vmul.f32 %v780, %v781
        %v783 = vsub.f32 1.0, %v782
        %v784 = vmul.f32 %v781, %v783
        %v785 = vadd.f32 %v781, %v784
        %vm786 = vweird.f32 %v780
        %vm787 = vweird.f32 %v781
        %vm788 = vmor %vm786, %vm787
        %v789 = vsel %vm788, %v781, %v785
        %v790 = vand.u32 2147483647, %v780
        %vm791 = vcmp.eq.f32.partialorder %v790, 8.507059e+37
        %v792 = vand.u32 %v780, 2147483648
        %v793 = vor.u32 1.1754944e-38, %v792
        %v794 = vsel %vm791, %v793, %v789
        %v795 = vmul.f32 1.0, %v794
        %v796 = vsel %vm371, %v795, 0.0
        %798 = vset.pattern.permute.xlu0 0
        %799 = vperm.xlu0 %798, %v796
        %v800 = vpop.permute.xlu0 %799
        %v802 = vmul.f32 %v800, %v702
        %v803 = vmul.f32 %v800, %v703
        %v804 = vadd.f32 %v697, %v802
        %v805 = vadd.f32 %v698, %v803
        %vm806 = vcmp.eq.s32.totalorder %v373, 3
        %v807 = vsel %vm806, %v800, %v700
        %s808 = scalar_lea.vmem %s273, 64 [#allocation2]
        %v809 = vld [vmem:[%s808] sm:$0xff]
        %v810 = vld [vmem:[%s808 + $0x8] sm:$0xff]
        %811 = vset.pattern.permute.xlu0 4
        %812 = vperm.xlu0 %811, %v365
        %v813 = vpop.permute.xlu0 %812
        %v815 = vmul.f32 %v813, %v381
        %816 = vmatpush.msra.mxu0 %v331
        %817 = vmatpush.msra.mxu0 %v330
        %818 = vmatpush.msra.mxu0 %v329
        %819 = vmatpush.msra.mxu0 %v328
        %820 = vmatpush.msra.mxu0 %v327
        %821 = vmatpush.msra.mxu0 %v326
        %822 = vmatpush.msra.mxu0 %v325
        %823 = vmatpush.msra.mxu0 %v324
        %824 = vmatpush.msra.mxu0 %v323
        %825 = vmatpush.msra.mxu0 %v322
        %826 = vmatpush.msra.mxu0 %v321
        %827 = vmatpush.msra.mxu0 %v320
        %828 = vmatpush.msra.mxu0 %v319
        %829 = vmatpush.msra.mxu0 %v318
        %830 = vmatpush.msra.mxu0 %v317
        %831 = vmatpush.msra.mxu0 %v316
        %832 = vmatmul.f32.gmra.mxu0 %v809
        %v833 = vpop.f32.mrf.mxu0
        %v834 = vadd.f32 %v815, %v833
        %835 = vdwg.mxu0
        %836 = vmatpush.msra.mxu0 %v347
        %837 = vmatpush.msra.mxu0 %v346
        %838 = vmatpush.msra.mxu0 %v345
        %839 = vmatpush.msra.mxu0 %v344
        %840 = vmatpush.msra.mxu0 %v343
        %841 = vmatpush.msra.mxu0 %v342
        %842 = vmatpush.msra.mxu0 %v341
        %843 = vmatpush.msra.mxu0 %v340
        %844 = vmatpush.msra.mxu0 %v339
        %845 = vmatpush.msra.mxu0 %v338
        %846 = vmatpush.msra.mxu0 %v337
        %847 = vmatpush.msra.mxu0 %v336
        %848 = vmatpush.msra.mxu0 %v335
        %849 = vmatpush.msra.mxu0 %v334
        %850 = vmatpush.msra.mxu0 %v333
        %851 = vmatpush.msra.mxu0 %v332
        %852 = vmatmul.f32.gmra.mxu0 %v810
        %v853 = vpop.f32.mrf.mxu0
        %v854 = vadd.f32 %v834, %v853
        %855 = vdwg.mxu0
        %v856 = vadd.f32 %v854, %v423
        %v857 = vmax.f32 %v856, 0.0
        %858 = vmatpush.msra.mxu0 %v363
        %859 = vmatpush.msra.mxu0 %v362
        %860 = vmatpush.msra.mxu0 %v361
        %861 = vmatpush.msra.mxu0 %v360
        %862 = vmatpush.msra.mxu0 %v359
        %863 = vmatpush.msra.mxu0 %v358
        %864 = vmatpush.msra.mxu0 %v357
        %865 = vmatpush.msra.mxu0 %v356
        %866 = vmatpush.msra.mxu0 %v355
        %867 = vmatpush.msra.mxu0 %v354
        %868 = vmatpush.msra.mxu0 %v353
        %869 = vmatpush.msra.mxu0 %v352
        %870 = vmatpush.msra.mxu0 %v351
        %871 = vmatpush.msra.mxu0 %v350
        %872 = vmatpush.msra.mxu0 %v349
        %873 = vmatpush.msra.mxu0 %v348
        %874 = vmatmul.f32.gmra.mxu0 %v857
        %v875 = vpop.f32.mrf.mxu0
        %v876 = vadd.f32 %v426, %v875
        %877 = vdwg.mxu0
        %v878 = vmax.f32 %v876, 0.0
        %v879 = vmul.f32 %v878, %v448
        %v880 = vsel %vm450, %v879, 0.0
        %881 = vadd.xlane.f32.xlu0 %v880
        %v882 = vpop.xlane.xlu0 %881
        %v883 = vadd.f32 %v882, %v454
        %v884 = vxor.u32 %v883, 2147483648
        %v885 = vmul.f32 %v884, 1.442695
        %v886 = vpow.pop %v885
        %v887 = vadd.f32 %v886, 1.0
        %v888 = vrcp.pop %v887
        %v889 = vmul.f32 %v887, %v888
        %v890 = vsub.f32 1.0, %v889
        %v891 = vmul.f32 %v888, %v890
        %v892 = vadd.f32 %v888, %v891
        %vm893 = vweird.f32 %v887
        %vm894 = vweird.f32 %v888
        %vm895 = vmor %vm893, %vm894
        %v896 = vsel %vm895, %v888, %v892
        %v897 = vand.u32 2147483647, %v887
        %vm898 = vcmp.eq.f32.partialorder %v897, 8.507059e+37
        %v899 = vand.u32 %v887, 2147483648
        %v900 = vor.u32 1.1754944e-38, %v899
        %v901 = vsel %vm898, %v900, %v896
        %v902 = vmul.f32 1.0, %v901
        %v903 = vsel %vm371, %v902, 0.0
        %905 = vset.pattern.permute.xlu0 0
        %906 = vperm.xlu0 %905, %v903
        %v907 = vpop.permute.xlu0 %906
        %v909 = vmul.f32 %v907, %v809
        %v910 = vmul.f32 %v907, %v810
        %v911 = vadd.f32 %v804, %v909
        %v912 = vadd.f32 %v805, %v910
        %vm913 = vcmp.eq.s32.totalorder %v373, 4
        %v914 = vsel %vm913, %v907, %v807
        %915 = vst [vmem:[%s301] sm:$0xff] %v911
        %916 = vst [vmem:[%s301 + $0x8] sm:$0xff] %v912
        %vm917 = vcmask 39936
        %918 = vst.msk [vmem:[%s315] sm:$0xff] %vm917, %v914
        %s919 = sand.u32 %s144, 1
        %s920 = scalar_lea.sflag [#allocation4], %s919
        %s921 = sand.u32 %s144, 1
        %s922 = smul.addr %s921, 16
        %s923 = scalar_lea.vmem [#allocation3], %s922
        %p924 = scmp.lt.s32.totalorder %s21, 1
        %s925 = scalar_select %p924, %s21, 1
        %s926 = smul.addr %s925, 8
        %s927 = scalar_lea.vmem %s6, %s926
        // Predicated region
        $region64: #{agent_weighting_forward.1} parent=58 // pred_check
          %p928 = pneg %p154
        $region65: #{agent_weighting_forward.1} parent=58 // pred_check_branch
          %930 = sbr.rel (%p928) target = $region67
        $region66: #{agent_weighting_forward.1} parent=58 // pred_region
          %932 = vsyncadd %s920, 0
          %s933 = smul.addr %s21, 2
          %s934 = smul.addr %s933, 8
          %s935 = scalar_lea.hbm %s5, %s934
          %s937 = sshll.u32 %s923, 4
          %s938 = int_to_ptr.vmem [resolvable:$true] %s937
          %s939 = sshll.u32 %s935, 4
          %s940 = int_to_ptr.hbm [resolvable:$true] %s939
          %942 = dma.vmem_to_hbm [thread:$0]  %s938, 256, %s940, %s920
        $region67: #{agent_weighting_forward.1} parent=58 // pred_fallthru
          _
        // Predicated region
        $region68: #{agent_weighting_forward.1} parent=58 // pred_check
          %p943 = pneg %p180
        $region69: #{agent_weighting_forward.1} parent=58 // pred_check_branch
          %945 = sbr.rel (%p943) target = $region71
        $region70: #{agent_weighting_forward.1} parent=58 // pred_region
          _
        $region71: #{agent_weighting_forward.1} parent=58 // pred_fallthru
          _
      $region59: #{agent_weighting_forward.1} parent=5 // pred_fallthru
        _
      %p946 = scmp.le.s32.totalorder 2, %s16
      // Predicated region
      $region72: #{agent_weighting_forward.1} parent=5 // pred_check
        %p947 = pneg %p946
      $region73: #{agent_weighting_forward.1} parent=5 // pred_check_branch
        %949 = sbr.rel (%p947) target = $region75
      $region74: #{agent_weighting_forward.1} parent=5 // pred_region
        %s950 = ssub.s32 %s16, 2
        // Predicated region
        $region76: #{agent_weighting_forward.1} parent=74 // pred_check
          %p951 = pneg %p160
        $region77: #{agent_weighting_forward.1} parent=74 // pred_check_branch
          %953 = sbr.rel (%p951) target = $region79
        $region78: #{agent_weighting_forward.1} parent=74 // pred_region
          %s954 = sand.u32 %s145, 1
          %s955 = scalar_lea.sflag [#allocation4], %s954
          %s956 = sand.u32 %s145, 1
          %s957 = smul.addr %s956, 16
          %s958 = scalar_lea.vmem [#allocation3], %s957
          %960 = dma.done %s955, 256
        $region79: #{agent_weighting_forward.1} parent=74 // pred_fallthru
          _
        // Predicated region
        $region80: #{agent_weighting_forward.1} parent=74 // pred_check
          %p961 = pneg %p186
        $region81: #{agent_weighting_forward.1} parent=74 // pred_check_branch
          %963 = sbr.rel (%p961) target = $region83
        $region82: #{agent_weighting_forward.1} parent=74 // pred_region
          %p964 = scmp.lt.s32.totalorder %s22, 1
          %s965 = scalar_select %p964, %s22, 1
          %s966 = smul.addr %s965, 8
          %s967 = scalar_lea.vmem %s6, %s966
        $region83: #{agent_weighting_forward.1} parent=74 // pred_fallthru
          _
      $region75: #{agent_weighting_forward.1} parent=5 // pred_fallthru
        _
    $region6: #{agent_weighting_forward.1} parent=1 // loop_footer
      %s20 = sadd.s32 1, %s16
    $region7: #{agent_weighting_forward.1} parent=1 // loop_footer_branch
      %15 = sbr.rel target = $region3
    $region8: #{agent_weighting_forward.1} parent=1 // loop_exit
      _
    %968 = vsyncpa [#allocation4], 1
    %s969 = scalar_lea.sflag [#allocation4], 1
    %970 = vsyncpa %s969, 1

</llo_original>
